<compile_context>
chip_gen: v7x
topology: tpu7x:2x2x1
jax: 0.10.0
libtpu: 0.0.40
codegen_flags: <defaults>
</compile_context>

<pallas_src>
import jax
import jax.numpy as jnp
from jax.experimental import pallas as pl
from jax.experimental.pallas import tpu as pltpu


def _mish_kernel(x_ref, o_ref):
    # x_ref / o_ref: (block_rows, cols) tiles in VMEM.
    x = x_ref[...].astype(jnp.float32)
    # Single-exp Mish:  tanh(softplus(x)) = (a^2 - 1) / (a^2 + 1),  a = 1 + e^x
    #                 = w / (w + 2),  w = e^x (e^x + 2)
    # Clamp before exp so w stays finite; the ratio saturates to 1 (y == x).
    t = jnp.exp(jnp.minimum(x, 20.0))
    w = t * (t + 2.0)
    o_ref[...] = (x * w / (w + 2.0)).astype(o_ref.dtype)


def mish_pallas(x, *, target_block_bytes=8 * 1024 * 1024, donate_input=False):
    """Elementwise Mish. Accepts any shape/float dtype; returns same shape."""
    orig_shape = x.shape
    dtype = x.dtype
    n = x.size
    if n == 0:
        return x
    itemsize = jnp.dtype(dtype).itemsize
    # Sublane packing of the dtype: f32 -> 8, bf16/f16 -> 16, int8/fp8 -> 32.
    sublane = {4: 8, 2: 16, 1: 32}.get(itemsize, 8)

    # Pick a lane-dense column count that divides n exactly -> pure reshape,
    # no pad / slice HBM round trips.
    cols = None
    for c in (1024, 512, 256, 128):
        if n % c == 0:
            cols = c
            break

    tail_pad = 0
    x_flat = x.reshape(-1)
    if cols is None:
        # Rare fallback: n not divisible by 128.  Pad by < 128 elements only
        # (mish(0) == 0, padded tail discarded below).
        cols = 128
        tail_pad = (-n) % cols
        x_flat = jnp.pad(x_flat, (0, tail_pad))
    padded_n = n + tail_pad
    rows = padded_n // cols
    x2 = x_flat.reshape(rows, cols)

    # Largest sublane-aligned row count whose block stays <= target_block_bytes.
    max_rows = max(
        sublane, ((target_block_bytes // (cols * itemsize)) // sublane) * sublane
    )
    # Aim for >= 2 grid blocks (v7x has 2 TensorCores sharing a "parallel" axis)
    # whenever there is more than one sublane tile of work.
    min_blocks = 2 if rows > sublane else 1
    rows_per_block = int(pl.cdiv(int(pl.cdiv(rows, min_blocks)), sublane)) * sublane
    block_rows = int(min(max_rows, max(sublane, rows_per_block)))
    num_blocks = int(pl.cdiv(rows, block_rows))

    call_kwargs = {}
    if donate_input:
        call_kwargs["input_output_aliases"] = {0: 0}

    out = pl.pallas_call(
        _mish_kernel,
        out_shape=jax.ShapeDtypeStruct((rows, cols), dtype),
        grid_spec=pltpu.PrefetchScalarGridSpec(
            num_scalar_prefetch=0,
            grid=(num_blocks,),
            in_specs=[pl.BlockSpec((block_rows, cols), lambda i: (i, 0))],
            out_specs=pl.BlockSpec((block_rows, cols), lambda i: (i, 0)),
        ),
        compiler_params=pltpu.CompilerParams(
            dimension_semantics=("parallel",),
            # 2 in-bufs + 2 out-bufs of <= 8 MiB each (32 MiB) fits comfortably,
            # including on v7x's 64 MiB per-core VMEM.
            vmem_limit_bytes=48 * 1024 * 1024,
        ),
        **call_kwargs,
    )(x2)

    if tail_pad:
        out = out.reshape(-1)[:n]
    return out.reshape(orig_shape)


if __name__ == "__main__":
    key = jax.random.PRNGKey(0)
    N, C, H, W = 2, 4, 16, 16
    x = jax.random.normal(key, (N, C, H, W), dtype=jnp.float32) * 3.0

    y = mish_pallas(x)
    jax.block_until_ready(y)

    # Reference: Mish in plain JAX (same math as x * tanh(softplus(x))).
    ref = x * jnp.tanh(jax.nn.softplus(x))

    assert y.shape == x.shape
    assert jnp.allclose(y, ref, rtol=1e-5, atol=1e-5), (
        float(jnp.max(jnp.abs(y - ref)))
    )

    print("KERNEL_OK")
</pallas_src>

<mosaic_0001>
module attributes {stable_mosaic.version = 11 : i64} {
  func.func @_mish_kernel(%arg0: i32, %arg1: memref<8x1024xf32, #tpu.memory_space<vmem>>, %arg2: memref<8x1024xf32, #tpu.memory_space<vmem>>) attributes {dimension_semantics = [#tpu.dimension_semantics<parallel>], iteration_bounds = array<i64: 1>, scalar_prefetch = 0 : i64, scratch_operands = 0 : i64, tpu.core_type = #tpu.core_type<tc>, window_params = [{transform_indices = @transform_0, window_bounds = array<i64: 8, 1024>}, {transform_indices = @transform_1, window_bounds = array<i64: 8, 1024>}]} {
    %c0 = arith.constant 0 : index
    %c0_0 = arith.constant 0 : index
    %0 = vector.load %arg1[%c0, %c0_0] : memref<8x1024xf32, #tpu.memory_space<vmem>>, vector<8x1024xf32>
    %cst = arith.constant 2.000000e+01 : f32
    %1 = vector.broadcast %cst : f32 to vector<8x1024xf32>
    %2 = arith.minimumf %0, %1 : vector<8x1024xf32>
    %3 = math.exp %2 : vector<8x1024xf32>
    %cst_1 = arith.constant 2.000000e+00 : f32
    %4 = vector.broadcast %cst_1 : f32 to vector<8x1024xf32>
    %5 = arith.addf %3, %4 : vector<8x1024xf32>
    %6 = arith.mulf %3, %5 : vector<8x1024xf32>
    %7 = arith.mulf %0, %6 : vector<8x1024xf32>
    %cst_2 = arith.constant 2.000000e+00 : f32
    %8 = vector.broadcast %cst_2 : f32 to vector<8x1024xf32>
    %9 = arith.addf %6, %8 : vector<8x1024xf32>
    %10 = arith.divf %7, %9 : vector<8x1024xf32>
    %c0_3 = arith.constant 0 : index
    %c0_4 = arith.constant 0 : index
    %11 = vector.load %arg2[%c0_3, %c0_4] : memref<8x1024xf32, #tpu.memory_space<vmem>>, vector<8x1024xf32>
    tpu.vector_store %arg2[%c0_3, %c0_4], %10 {strides = array<i32>} : memref<8x1024xf32, #tpu.memory_space<vmem>>, vector<8x1024xf32>,
    return
  }
  func.func @transform_0(%arg0: i32) -> (i32, i32) {
    %c0_i32 = arith.constant 0 : i32
    %c0_i32_0 = arith.constant 0 : i32
    return %arg0, %c0_i32 : i32, i32
  }
  func.func @transform_1(%arg0: i32) -> (i32, i32) {
    %c0_i32 = arith.constant 0 : i32
    %c0_i32_0 = arith.constant 0 : i32
    return %arg0, %c0_i32 : i32, i32
  }
}

</mosaic_0001>

<llo_original>
// kernel: tpu_custom_call.1
$region0: #{tpu_custom_call.1}
  #allocation0 [shape = 'u32[]', space=smem, size = 0x4, offset = 0x4, fixed_abs, tag = 'smem constant byte address 0x4 - core index']
  #allocation1 [shape = 'u32[144,128]{1,0:T(1,128)}', space=vmem, size = 0x12000, scoped, tag = 'internal scratch']
  %s0 = inlined_call_operand.hbm [shape: f32[2,1024], index: 0, kind: input, shape index: {}]
  %s1 = inlined_call_operand.hbm [shape: f32[2,1024], index: 1, kind: output, shape index: {}]
  %s2 = sld [smem:[#allocation0]]
  $region18: #{tpu_custom_call.1} parent=0
    _
  %s4 = ssub.s32 1, %s2
  %s5 = scalar_select 0, %s4, %s2
  $region1: #{tpu_custom_call.1} parent=0
    #allocation2 [shape = 'u8[32768]{0}', space=vmem, size = 0x8000, scoped, tag = 'input window, operand 0, single buffered']
    #allocation3 [shape = 's32[1]{0}', space=sflag, size = 0x4, scoped, tag = 'scoped memory for tpu_custom_call.1']
    #allocation4 [shape = 's32[1]{0}', space=sflag, size = 0x4, scoped, tag = 'scoped memory for tpu_custom_call.1']
    #allocation5 [shape = 'u8[32768]{0}', space=vmem, size = 0x8000, scoped, tag = 'output window, operand 0, single buffered']
    %6 = vsyncpa [#allocation3], 0
    %7 = vsyncpa [#allocation4], 0
    // Predicated region
    $region2: #{tpu_custom_call.1} parent=1 // pred_check
      _
    $region3: #{tpu_custom_call.1} parent=1 // pred_check_branch
      %9 = sbr.rel (0) target = $region5
    $region4: #{tpu_custom_call.1} parent=1 // pred_region
      %s11 = ssub.s32 1024, 256
      %12 = vsyncadd [#allocation3], %s11
      %s13 = sshll.u32 [#allocation2], 4
      %s14 = int_to_ptr.vmem [resolvable:$true] %s13
      %19 = dma.hbm_to_vmem [thread:$0]  %s0, 256, %s14, [#allocation3], 256, 256, 16
    $region5: #{tpu_custom_call.1} parent=1 // pred_fallthru
      _
    // Predicated region
    $region6: #{tpu_custom_call.1} parent=1 // pred_check
      _
    $region7: #{tpu_custom_call.1} parent=1 // pred_check_branch
      %21 = sbr.rel (0) target = $region9
    $region8: #{tpu_custom_call.1} parent=1 // pred_region
      %22 = dma.done [#allocation3], 1024
    $region9: #{tpu_custom_call.1} parent=1 // pred_fallthru
      _
    %v23 = vld [vmem:[#allocation2] sm:$0xff]
    %v24 = vld [vmem:[#allocation2 + $0x8] sm:$0xff]
    %v25 = vld [vmem:[#allocation2 + $0x10] sm:$0xff]
    %v26 = vld [vmem:[#allocation2 + $0x18] sm:$0xff]
    %v27 = vld [vmem:[#allocation2 + $0x20] sm:$0xff]
    %v28 = vld [vmem:[#allocation2 + $0x28] sm:$0xff]
    %v29 = vld [vmem:[#allocation2 + $0x30] sm:$0xff]
    %v30 = vld [vmem:[#allocation2 + $0x38] sm:$0xff]
    %v31 = vmin.f32 %v23, 20.0
    %v32 = vmin.f32 %v24, 20.0
    %v33 = vmin.f32 %v25, 20.0
    %v34 = vmin.f32 %v26, 20.0
    %v35 = vmin.f32 %v27, 20.0
    %v36 = vmin.f32 %v28, 20.0
    %v37 = vmin.f32 %v29, 20.0
    %v38 = vmin.f32 %v30, 20.0
    %v39 = vmul.f32 %v31, 1.442695
    %v40 = vpow.pop %v39
    %v41 = vmul.f32 %v32, 1.442695
    %v42 = vpow.pop %v41
    %v43 = vmul.f32 %v33, 1.442695
    %v44 = vpow.pop %v43
    %v45 = vmul.f32 %v34, 1.442695
    %v46 = vpow.pop %v45
    %v47 = vmul.f32 %v35, 1.442695
    %v48 = vpow.pop %v47
    %v49 = vmul.f32 %v36, 1.442695
    %v50 = vpow.pop %v49
    %v51 = vmul.f32 %v37, 1.442695
    %v52 = vpow.pop %v51
    %v53 = vmul.f32 %v38, 1.442695
    %v54 = vpow.pop %v53
    %v55 = vadd.f32 %v40, 2.0
    %v56 = vadd.f32 %v42, 2.0
    %v57 = vadd.f32 %v44, 2.0
    %v58 = vadd.f32 %v46, 2.0
    %v59 = vadd.f32 %v48, 2.0
    %v60 = vadd.f32 %v50, 2.0
    %v61 = vadd.f32 %v52, 2.0
    %v62 = vadd.f32 %v54, 2.0
    %v63 = vmul.f32 %v40, %v55
    %v64 = vmul.f32 %v42, %v56
    %v65 = vmul.f32 %v44, %v57
    %v66 = vmul.f32 %v46, %v58
    %v67 = vmul.f32 %v48, %v59
    %v68 = vmul.f32 %v50, %v60
    %v69 = vmul.f32 %v52, %v61
    %v70 = vmul.f32 %v54, %v62
    %v71 = vmul.f32 %v23, %v63
    %v72 = vmul.f32 %v24, %v64
    %v73 = vmul.f32 %v25, %v65
    %v74 = vmul.f32 %v26, %v66
    %v75 = vmul.f32 %v27, %v67
    %v76 = vmul.f32 %v28, %v68
    %v77 = vmul.f32 %v29, %v69
    %v78 = vmul.f32 %v30, %v70
    %v79 = vadd.f32 %v63, 2.0
    %v80 = vadd.f32 %v64, 2.0
    %v81 = vadd.f32 %v65, 2.0
    %v82 = vadd.f32 %v66, 2.0
    %v83 = vadd.f32 %v67, 2.0
    %v84 = vadd.f32 %v68, 2.0
    %v85 = vadd.f32 %v69, 2.0
    %v86 = vadd.f32 %v70, 2.0
    %v87 = vrcp.pop %v79
    %v88 = vmul.f32 %v71, %v87
    %v89 = vrcp.pop %v80
    %v90 = vmul.f32 %v72, %v89
    %v91 = vrcp.pop %v81
    %v92 = vmul.f32 %v73, %v91
    %v93 = vrcp.pop %v82
    %v94 = vmul.f32 %v74, %v93
    %v95 = vrcp.pop %v83
    %v96 = vmul.f32 %v75, %v95
    %v97 = vrcp.pop %v84
    %v98 = vmul.f32 %v76, %v97
    %v99 = vrcp.pop %v85
    %v100 = vmul.f32 %v77, %v99
    %v101 = vrcp.pop %v86
    %v102 = vmul.f32 %v78, %v101
    %103 = vst [vmem:[#allocation5] sm:$0xff] %v88
    %104 = vst [vmem:[#allocation5 + $0x8] sm:$0xff] %v90
    %105 = vst [vmem:[#allocation5 + $0x10] sm:$0xff] %v92
    %106 = vst [vmem:[#allocation5 + $0x18] sm:$0xff] %v94
    %107 = vst [vmem:[#allocation5 + $0x20] sm:$0xff] %v96
    %108 = vst [vmem:[#allocation5 + $0x28] sm:$0xff] %v98
    %109 = vst [vmem:[#allocation5 + $0x30] sm:$0xff] %v100
    %110 = vst [vmem:[#allocation5 + $0x38] sm:$0xff] %v102
    // Predicated region
    $region10: #{tpu_custom_call.1} parent=1 // pred_check
      _
    $region11: #{tpu_custom_call.1} parent=1 // pred_check_branch
      %112 = sbr.rel (0) target = $region13
    $region12: #{tpu_custom_call.1} parent=1 // pred_region
      %s114 = ssub.s32 1024, 256
      %115 = vsyncadd [#allocation4], %s114
      %s116 = sshll.u32 [#allocation5], 4
      %s117 = int_to_ptr.vmem [resolvable:$true] %s116
      %122 = dma.vmem_to_hbm [thread:$0]  %s117, 256, %s1, [#allocation4], 256, 256, 16
    $region13: #{tpu_custom_call.1} parent=1 // pred_fallthru
      _
    // Predicated region
    $region14: #{tpu_custom_call.1} parent=1 // pred_check
      _
    $region15: #{tpu_custom_call.1} parent=1 // pred_check_branch
      %124 = sbr.rel (0) target = $region17
    $region16: #{tpu_custom_call.1} parent=1 // pred_region
      %125 = dma.done [#allocation4], 1024
    $region17: #{tpu_custom_call.1} parent=1 // pred_fallthru
      _
    %126 = vsyncpa [#allocation3], 1
    %127 = vsyncpa [#allocation4], 1

</llo_original>
